<compile_context>
chip_gen: v7x
topology: tpu7x:2x2x1
jax: 0.10.0
libtpu: 0.0.40
codegen_flags: <defaults>
</compile_context>

<pallas_src>
import math
from functools import partial

import jax
import jax.numpy as jnp
from jax.experimental import pallas as pl
from jax.experimental.pallas import tpu as pltpu


LANE = 128           # TPU lane width: output feature dim padded to a multiple of this
TILE_B_MAX = 1024    # batch tile (multiple of 8); small VMEM footprint even double-buffered


def _round_up(x, m):
    return ((x + m - 1) // m) * m


def dqn_mlp_kernel(x_ref, w1_ref, b1_ref, w2_ref, b2_ref, w3_ref, b3_ref, o_ref):
    """Fused 3-layer MLP on one batch tile: relu(x@W1+b1) -> relu(.@W2+b2) -> .@W3+b3."""
    wt = w1_ref.dtype  # MXU compute dtype (bf16); accumulation stays f32
    x = x_ref[...]
    h1 = jnp.dot(x.astype(wt), w1_ref[...], preferred_element_type=jnp.float32) + b1_ref[...]
    h1 = jnp.maximum(h1, 0.0)            # ReLU; Dropout(0.1) == identity in eval
    h2 = jnp.dot(h1.astype(wt), w2_ref[...], preferred_element_type=jnp.float32) + b2_ref[...]
    h2 = jnp.maximum(h2, 0.0)            # ReLU; Dropout(0.1) == identity in eval
    o = jnp.dot(h2.astype(wt), w3_ref[...], preferred_element_type=jnp.float32) + b3_ref[...]
    o_ref[...] = o.astype(o_ref.dtype)


def prepare_params(params, compute_dtype=jnp.bfloat16):
    """Cast weights to the MXU compute dtype and zero-pad the last layer to a lane-dense width."""
    w1, b1, w2, b2, w3, b3 = params
    out_dim = w3.shape[1]
    out_pad = _round_up(out_dim, LANE)
    w3 = jnp.pad(w3, ((0, 0), (0, out_pad - out_dim)))
    b3 = jnp.pad(b3, ((0, 0), (0, out_pad - out_dim)))
    cast_w = lambda w: w.astype(compute_dtype)
    cast_b = lambda b: b.astype(jnp.float32)      # biases / elementwise stay f32 (v5e-friendly)
    prepared = (cast_w(w1), cast_b(b1), cast_w(w2), cast_b(b2), cast_w(w3), cast_b(b3))
    return prepared, out_dim


@partial(jax.jit, static_argnums=(2, 3))
def dqn_forward(state, prepared_params, out_dim, tile_b=None):
    """Run the fused DQN MLP kernel over a batch grid with VMEM-resident weights."""
    w1, b1, w2, b2, w3, b3 = prepared_params
    B, in_dim = state.shape
    h1_dim, h2_dim, out_pad = w1.shape[1], w2.shape[1], w3.shape[1]

    if tile_b is None:
        tile_b = min(TILE_B_MAX, _round_up(B, 8))
    B_pad = _round_up(B, tile_b)
    if B_pad != B:
        state = jnp.pad(state, ((0, B_pad - B), (0, 0)))   # zero rows, sliced off below
    grid = (B_pad // tile_b,)

    # Weights/biases: full-array blocks with a constant index map -> DMA'd once, VMEM-resident.
    const = lambda shape: pl.BlockSpec(shape, lambda i: (0,) * len(shape))

    flops = 2 * B_pad * (in_dim * h1_dim + h1_dim * h2_dim + h2_dim * out_pad)
    bytes_accessed = (
        state.size * state.dtype.itemsize
        + sum(a.size * a.dtype.itemsize for a in prepared_params)
        + B_pad * out_pad * 4
    )

    out_padded = pl.pallas_call(
        dqn_mlp_kernel,
        out_shape=jax.ShapeDtypeStruct((B_pad, out_pad), jnp.float32),
        grid=grid,
        in_specs=[
            pl.BlockSpec((tile_b, in_dim), lambda i: (i, 0)),
            const(w1.shape), const(b1.shape),
            const(w2.shape), const(b2.shape),
            const(w3.shape), const(b3.shape),
        ],
        out_specs=pl.BlockSpec((tile_b, out_pad), lambda i: (i, 0)),
        compiler_params=pltpu.CompilerParams(dimension_semantics=("parallel",)),
        cost_estimate=pl.CostEstimate(
            flops=flops, transcendentals=0, bytes_accessed=bytes_accessed),
    )(state, w1, b1, w2, b2, w3, b3)

    return out_padded[:B, :out_dim]


def init_linear(key, fan_in, fan_out):
    """nn.Linear default init U(-1/sqrt(fan_in), 1/sqrt(fan_in)); weight stored as (in, out)."""
    kw, kb = jax.random.split(key)
    bound = 1.0 / math.sqrt(fan_in)
    w = jax.random.uniform(kw, (fan_in, fan_out), jnp.float32, -bound, bound)
    b = jax.random.uniform(kb, (1, fan_out), jnp.float32, -bound, bound)
    return w, b


def init_dqn_params(key, input_dim, output_dim, hidden_dims=(64, 32)):
    dims = [input_dim, *hidden_dims, output_dim]
    params = []
    for i in range(len(dims) - 1):
        key, sub = jax.random.split(key)
        w, b = init_linear(sub, dims[i], dims[i + 1])
        params.extend([w, b])
    return tuple(params)


def dqn_reference(state, params, compute_dtype=jnp.float32):
    """Plain-JAX reference (eval-mode dropout == identity), matching the kernel's compute dtype."""
    w1, b1, w2, b2, w3, b3 = params
    mm = lambda x, w: jnp.dot(x.astype(compute_dtype), w.astype(compute_dtype),
                              preferred_element_type=jnp.float32)
    h1 = jnp.maximum(mm(state, w1) + b1, 0.0)
    h2 = jnp.maximum(mm(h1, w2) + b2, 0.0)
    return mm(h2, w3) + b3


if __name__ == "__main__":
    key = jax.random.PRNGKey(0)
    k_x1, k_x2, k_p = jax.random.split(key, 3)

    batch, input_dim, output_dim = 8, 16, 8
    params = init_dqn_params(k_p, input_dim, output_dim, (64, 32))
    prepared, out_dim = prepare_params(params, compute_dtype=jnp.bfloat16)

    # Small batch: single grid step.
    state = jax.random.normal(k_x1, (batch, input_dim), jnp.float32)
    out = jax.block_until_ready(dqn_forward(state, prepared, out_dim))
    ref = dqn_reference(state, params, compute_dtype=jnp.bfloat16)
    assert out.shape == (batch, output_dim)
    assert jnp.allclose(out, ref, atol=2e-3, rtol=2e-3), "small-batch mismatch vs reference"

    # Larger batch, not a multiple of the tile: exercises grid iteration + batch padding.
    big_batch = 1000
    state_big = jax.random.normal(k_x2, (big_batch, input_dim), jnp.float32)
    out_big = jax.block_until_ready(dqn_forward(state_big, prepared, out_dim))
    ref_big = dqn_reference(state_big, params, compute_dtype=jnp.bfloat16)
    assert out_big.shape == (big_batch, output_dim)
    assert jnp.allclose(out_big, ref_big, atol=2e-3, rtol=2e-3), "large-batch mismatch vs reference"

    print("KERNEL_OK")
</pallas_src>

<mosaic_0001>
module attributes {stable_mosaic.version = 11 : i64} {
  func.func @dqn_mlp_kernel(%arg0: i32, %arg1: memref<8x16xf32, #tpu.memory_space<vmem>>, %arg2: memref<16x64xbf16, #tpu.memory_space<vmem>>, %arg3: memref<1x64xf32, #tpu.memory_space<vmem>>, %arg4: memref<64x32xbf16, #tpu.memory_space<vmem>>, %arg5: memref<1x32xf32, #tpu.memory_space<vmem>>, %arg6: memref<32x128xbf16, #tpu.memory_space<vmem>>, %arg7: memref<1x128xf32, #tpu.memory_space<vmem>>, %arg8: memref<8x128xf32, #tpu.memory_space<vmem>>) attributes {dimension_semantics = [#tpu.dimension_semantics<parallel>], iteration_bounds = array<i64: 1>, scalar_prefetch = 0 : i64, scratch_operands = 0 : i64, tpu.core_type = #tpu.core_type<tc>, window_params = [{transform_indices = @transform_0, window_bounds = array<i64: 8, 16>}, {pipeline_mode = #tpu.pipeline_mode<synchronous>, transform_indices = @transform_1, window_bounds = array<i64: 16, 64>}, {pipeline_mode = #tpu.pipeline_mode<synchronous>, transform_indices = @transform_2, window_bounds = array<i64: 1, 64>}, {pipeline_mode = #tpu.pipeline_mode<synchronous>, transform_indices = @transform_3, window_bounds = array<i64: 64, 32>}, {pipeline_mode = #tpu.pipeline_mode<synchronous>, transform_indices = @transform_4, window_bounds = array<i64: 1, 32>}, {pipeline_mode = #tpu.pipeline_mode<synchronous>, transform_indices = @transform_5, window_bounds = array<i64: 32, 128>}, {pipeline_mode = #tpu.pipeline_mode<synchronous>, transform_indices = @transform_6, window_bounds = array<i64: 1, 128>}, {transform_indices = @transform_7, window_bounds = array<i64: 8, 128>}]} {
    %c0 = arith.constant 0 : index
    %c0_0 = arith.constant 0 : index
    %0 = vector.load %arg1[%c0, %c0_0] : memref<8x16xf32, #tpu.memory_space<vmem>>, vector<8x16xf32>
    %1 = arith.truncf %0 : vector<8x16xf32> to vector<8x16xbf16>
    %c0_1 = arith.constant 0 : index
    %c0_2 = arith.constant 0 : index
    %2 = vector.load %arg2[%c0_1, %c0_2] : memref<16x64xbf16, #tpu.memory_space<vmem>>, vector<16x64xbf16>
    %cst = arith.constant dense<0.000000e+00> : vector<8x64xf32>
    %3 = tpu.matmul %1, %2, %cst {dimension_numbers = #tpu.dot_dimension_numbers<[1], [0], [0], [1], [0, 0, 1, 1], [], []>} : vector<8x16xbf16>, vector<16x64xbf16>, vector<8x64xf32> -> vector<8x64xf32>
    %c0_3 = arith.constant 0 : index
    %c0_4 = arith.constant 0 : index
    %4 = vector.load %arg3[%c0_3, %c0_4] : memref<1x64xf32, #tpu.memory_space<vmem>>, vector<1x64xf32>
    %5 = vector.broadcast %4 : vector<1x64xf32> to vector<8x64xf32>
    %6 = arith.addf %3, %5 : vector<8x64xf32>
    %cst_5 = arith.constant 0.000000e+00 : f32
    %7 = vector.broadcast %cst_5 : f32 to vector<8x64xf32>
    %8 = arith.maximumf %6, %7 : vector<8x64xf32>
    %9 = arith.truncf %8 : vector<8x64xf32> to vector<8x64xbf16>
    %c0_6 = arith.constant 0 : index
    %c0_7 = arith.constant 0 : index
    %10 = vector.load %arg4[%c0_6, %c0_7] : memref<64x32xbf16, #tpu.memory_space<vmem>>, vector<64x32xbf16>
    %cst_8 = arith.constant dense<0.000000e+00> : vector<8x32xf32>
    %11 = tpu.matmul %9, %10, %cst_8 {dimension_numbers = #tpu.dot_dimension_numbers<[1], [0], [0], [1], [0, 0, 1, 1], [], []>} : vector<8x64xbf16>, vector<64x32xbf16>, vector<8x32xf32> -> vector<8x32xf32>
    %c0_9 = arith.constant 0 : index
    %c0_10 = arith.constant 0 : index
    %12 = vector.load %arg5[%c0_9, %c0_10] : memref<1x32xf32, #tpu.memory_space<vmem>>, vector<1x32xf32>
    %13 = vector.broadcast %12 : vector<1x32xf32> to vector<8x32xf32>
    %14 = arith.addf %11, %13 : vector<8x32xf32>
    %cst_11 = arith.constant 0.000000e+00 : f32
    %15 = vector.broadcast %cst_11 : f32 to vector<8x32xf32>
    %16 = arith.maximumf %14, %15 : vector<8x32xf32>
    %17 = arith.truncf %16 : vector<8x32xf32> to vector<8x32xbf16>
    %c0_12 = arith.constant 0 : index
    %c0_13 = arith.constant 0 : index
    %18 = vector.load %arg6[%c0_12, %c0_13] : memref<32x128xbf16, #tpu.memory_space<vmem>>, vector<32x128xbf16>
    %cst_14 = arith.constant dense<0.000000e+00> : vector<8x128xf32>
    %19 = tpu.matmul %17, %18, %cst_14 {dimension_numbers = #tpu.dot_dimension_numbers<[1], [0], [0], [1], [0, 0, 1, 1], [], []>} : vector<8x32xbf16>, vector<32x128xbf16>, vector<8x128xf32> -> vector<8x128xf32>
    %c0_15 = arith.constant 0 : index
    %c0_16 = arith.constant 0 : index
    %20 = vector.load %arg7[%c0_15, %c0_16] : memref<1x128xf32, #tpu.memory_space<vmem>>, vector<1x128xf32>
    %21 = vector.broadcast %20 : vector<1x128xf32> to vector<8x128xf32>
    %22 = arith.addf %19, %21 : vector<8x128xf32>
    %c0_17 = arith.constant 0 : index
    %c0_18 = arith.constant 0 : index
    %23 = vector.load %arg8[%c0_17, %c0_18] : memref<8x128xf32, #tpu.memory_space<vmem>>, vector<8x128xf32>
    tpu.vector_store %arg8[%c0_17, %c0_18], %22 {strides = array<i32>} : memref<8x128xf32, #tpu.memory_space<vmem>>, vector<8x128xf32>,
    return
  }
  func.func @transform_0(%arg0: i32) -> (i32, i32) {
    %c0_i32 = arith.constant 0 : i32
    %c0_i32_0 = arith.constant 0 : i32
    return %arg0, %c0_i32 : i32, i32
  }
  func.func @transform_1(%arg0: i32) -> (i32, i32) {
    %c0_i32 = arith.constant 0 : i32
    %c0_i32_0 = arith.constant 0 : i32
    %c0_i32_1 = arith.constant 0 : i32
    return %c0_i32, %c0_i32_0 : i32, i32
  }
  func.func @transform_2(%arg0: i32) -> (i32, i32) {
    %c0_i32 = arith.constant 0 : i32
    %c0_i32_0 = arith.constant 0 : i32
    %c0_i32_1 = arith.constant 0 : i32
    return %c0_i32, %c0_i32_0 : i32, i32
  }
  func.func @transform_3(%arg0: i32) -> (i32, i32) {
    %c0_i32 = arith.constant 0 : i32
    %c0_i32_0 = arith.constant 0 : i32
    %c0_i32_1 = arith.constant 0 : i32
    return %c0_i32, %c0_i32_0 : i32, i32
  }
  func.func @transform_4(%arg0: i32) -> (i32, i32) {
    %c0_i32 = arith.constant 0 : i32
    %c0_i32_0 = arith.constant 0 : i32
    %c0_i32_1 = arith.constant 0 : i32
    return %c0_i32, %c0_i32_0 : i32, i32
  }
  func.func @transform_5(%arg0: i32) -> (i32, i32) {
    %c0_i32 = arith.constant 0 : i32
    %c0_i32_0 = arith.constant 0 : i32
    %c0_i32_1 = arith.constant 0 : i32
    return %c0_i32, %c0_i32_0 : i32, i32
  }
  func.func @transform_6(%arg0: i32) -> (i32, i32) {
    %c0_i32 = arith.constant 0 : i32
    %c0_i32_0 = arith.constant 0 : i32
    %c0_i32_1 = arith.constant 0 : i32
    return %c0_i32, %c0_i32_0 : i32, i32
  }
  func.func @transform_7(%arg0: i32) -> (i32, i32) {
    %c0_i32 = arith.constant 0 : i32
    %c0_i32_0 = arith.constant 0 : i32
    return %arg0, %c0_i32 : i32, i32
  }
}

</mosaic_0001>

<llo_original>
// kernel: dqn_forward.1
$region0: #{dqn_forward.1}
  #allocation0 [shape = 'u32[]', space=smem, size = 0x4, offset = 0x4, fixed_abs, tag = 'smem constant byte address 0x4 - core index']
  #allocation1 [shape = 'u32[144,128]{1,0:T(1,128)}', space=vmem, size = 0x12000, scoped, tag = 'internal scratch']
  %s0 = inlined_call_operand.vmem [shape: f32[8,16], index: 0, kind: input, shape index: {}]
  %s1 = inlined_call_operand.vmem [shape: bf16[16,64], index: 1, kind: input, shape index: {}]
  %s2 = inlined_call_operand.vmem [shape: f32[1,64], index: 2, kind: input, shape index: {}]
  %s3 = inlined_call_operand.vmem [shape: bf16[64,32], index: 3, kind: input, shape index: {}]
  %s4 = inlined_call_operand.vmem [shape: f32[1,32], index: 4, kind: input, shape index: {}]
  %s5 = inlined_call_operand.vmem [shape: bf16[32,128], index: 5, kind: input, shape index: {}]
  %s6 = inlined_call_operand.vmem [shape: f32[1,128], index: 6, kind: input, shape index: {}]
  %s7 = inlined_call_operand.hbm [shape: f32[8,128], index: 7, kind: output, shape index: {}]
  %s8 = sld [smem:[#allocation0]]
  $region38: #{dqn_forward.1} parent=0
    _
  %s10 = ssub.s32 1, %s8
  %s11 = scalar_select 0, %s10, %s8
  $region1: #{dqn_forward.1} parent=0
    #allocation2 [shape = 'u8[4096]{0}', space=vmem, size = 0x1000, scoped, tag = 'output window, operand 0, single buffered']
    #allocation3 [shape = 's32[1]{0}', space=sflag, size = 0x4, scoped, tag = 'scoped memory for dqn_forward.1']
    %12 = vsyncpa [#allocation3], 0
    // Predicated region
    $region2: #{dqn_forward.1} parent=1 // pred_check
      _
    $region3: #{dqn_forward.1} parent=1 // pred_check_branch
      %14 = sbr.rel (0) target = $region5
    $region4: #{dqn_forward.1} parent=1 // pred_region
      _
    $region5: #{dqn_forward.1} parent=1 // pred_fallthru
      _
    // Predicated region
    $region6: #{dqn_forward.1} parent=1 // pred_check
      _
    $region7: #{dqn_forward.1} parent=1 // pred_check_branch
      %16 = sbr.rel (0) target = $region9
    $region8: #{dqn_forward.1} parent=1 // pred_region
      _
    $region9: #{dqn_forward.1} parent=1 // pred_fallthru
      _
    // Predicated region
    $region10: #{dqn_forward.1} parent=1 // pred_check
      _
    $region11: #{dqn_forward.1} parent=1 // pred_check_branch
      %18 = sbr.rel (0) target = $region13
    $region12: #{dqn_forward.1} parent=1 // pred_region
      _
    $region13: #{dqn_forward.1} parent=1 // pred_fallthru
      _
    // Predicated region
    $region14: #{dqn_forward.1} parent=1 // pred_check
      _
    $region15: #{dqn_forward.1} parent=1 // pred_check_branch
      %20 = sbr.rel (0) target = $region17
    $region16: #{dqn_forward.1} parent=1 // pred_region
      _
    $region17: #{dqn_forward.1} parent=1 // pred_fallthru
      _
    // Predicated region
    $region18: #{dqn_forward.1} parent=1 // pred_check
      _
    $region19: #{dqn_forward.1} parent=1 // pred_check_branch
      %22 = sbr.rel (0) target = $region21
    $region20: #{dqn_forward.1} parent=1 // pred_region
      _
    $region21: #{dqn_forward.1} parent=1 // pred_fallthru
      _
    // Predicated region
    $region22: #{dqn_forward.1} parent=1 // pred_check
      _
    $region23: #{dqn_forward.1} parent=1 // pred_check_branch
      %24 = sbr.rel (0) target = $region25
    $region24: #{dqn_forward.1} parent=1 // pred_region
      _
    $region25: #{dqn_forward.1} parent=1 // pred_fallthru
      _
    // Predicated region
    $region26: #{dqn_forward.1} parent=1 // pred_check
      _
    $region27: #{dqn_forward.1} parent=1 // pred_check_branch
      %26 = sbr.rel (0) target = $region29
    $region28: #{dqn_forward.1} parent=1 // pred_region
      _
    $region29: #{dqn_forward.1} parent=1 // pred_fallthru
      _
    %v28 = vld [vmem:[%s0] sm:$0xff]
    %v29 = vpack.c.bf16 %v28, %v28
    %v30 = vld [vmem:[%s1] sm:$0xf]
    %v31 = vld [vmem:[%s1 + $0x4] sm:$0xf]
    %v32 = vld [vmem:[%s2] sm:$0x1]
    %v34 = vlaneseq
    %v35 = vshrl.u32 %v34, 7
    %v36 = vsub.s32 0, %v35
    %v37 = vrot.slane %v32, %v36
    %v41 = vunpack.c.l.b16 %v30
    %v42 = vunpack.c.l.b16 %v31
    %v43 = vpack.c.b16 %v42, %v41
    %vm45 = vcmask 130048
    %v47 = vsel %vm45, %v29, 0
    %49 = vmatprep.subr.bf16.mxu0 0
    %50 = vmatpush1.bf16.msra.mxu0 %v43
    %51 = vmatprep.subr.bf16.mxu0 0
    %52 = vmatpush1.bf16.msra.mxu0 0
    %53 = vmatprep.subr.bf16.mxu0 0
    %54 = vmatpush1.bf16.msra.mxu0 0
    %55 = vmatprep.subr.bf16.mxu0 0
    %56 = vmatpush1.bf16.msra.mxu0 0
    %57 = vmatprep.subr.bf16.mxu0 0
    %58 = vmatpush1.bf16.msra.mxu0 0
    %59 = vmatprep.subr.bf16.mxu0 0
    %60 = vmatpush1.bf16.msra.mxu0 0
    %61 = vmatprep.subr.bf16.mxu0 0
    %62 = vmatpush1.bf16.msra.mxu0 0
    %63 = vmatprep.subr.bf16.mxu0 0
    %64 = vmatpush1.bf16.msra.mxu0 0
    %65 = vmatprep.subr.bf16.mxu0 0
    %66 = vmatpush1.bf16.msra.mxu0 0
    %67 = vmatprep.subr.bf16.mxu0 0
    %68 = vmatpush1.bf16.msra.mxu0 0
    %69 = vmatprep.subr.bf16.mxu0 0
    %70 = vmatpush1.bf16.msra.mxu0 0
    %71 = vmatprep.subr.bf16.mxu0 0
    %72 = vmatpush1.bf16.msra.mxu0 0
    %73 = vmatprep.subr.bf16.mxu0 0
    %74 = vmatpush1.bf16.msra.mxu0 0
    %75 = vmatprep.subr.bf16.mxu0 0
    %76 = vmatpush1.bf16.msra.mxu0 0
    %77 = vmatprep.subr.bf16.mxu0 0
    %78 = vmatpush1.bf16.msra.mxu0 0
    %79 = vmatprep.subr.bf16.mxu0 0
    %80 = vmatpush1.bf16.msra.mxu0 0
    %81 = vmatprep.mubr.bf16.mxu0 0
    %82 = vmatmul.mubr.bf16.gmra.mrb[0].mxu0 %v47
    %v83 = vpop.f32.mrb[0].mxu0
    %v84 = vadd.f32 %v37, %v83
    %v85 = vpop.f32.mrb[0].mxu0
    %v86 = vpop.f32.mrb[0].mxu0
    %v87 = vpop.f32.mrb[0].mxu0
    %88 = vdwg.mxu0
    %v89 = vmax.f32 %v84, 0.0
    %v90 = vpack.c.bf16 %v89, %v89
    %v91 = vld [vmem:[%s3] sm:$0xf]
    %v92 = vld [vmem:[%s3 + $0x4] sm:$0xf]
    %v93 = vld [vmem:[%s3 + $0x8] sm:$0xf]
    %v94 = vld [vmem:[%s3 + $0xc] sm:$0xf]
    %v95 = vld [vmem:[%s3 + $0x10] sm:$0xf]
    %v96 = vld [vmem:[%s3 + $0x14] sm:$0xf]
    %v97 = vld [vmem:[%s3 + $0x18] sm:$0xf]
    %v98 = vld [vmem:[%s3 + $0x1c] sm:$0xf]
    %v99 = vld [vmem:[%s4] sm:$0x1]
    %v101 = vlaneseq
    %v102 = vshrl.u32 %v101, 7
    %v103 = vsub.s32 0, %v102
    %v104 = vrot.slane %v99, %v103
    %v114 = vunpack.c.l.b16 %v91
    %v115 = vunpack.c.l.b16 %v92
    %v116 = vunpack.c.l.b16 %v93
    %v117 = vunpack.c.l.b16 %v94
    %v118 = vunpack.c.l.b16 %v95
    %v119 = vunpack.c.l.b16 %v96
    %v120 = vunpack.c.l.b16 %v97
    %v121 = vunpack.c.l.b16 %v98
    %v122 = vpack.c.b16 %v115, %v114
    %v123 = vpack.c.b16 %v117, %v116
    %v124 = vpack.c.b16 %v119, %v118
    %v125 = vpack.c.b16 %v121, %v120
    %vm130 = vcmask 523264
    %v132 = vsel %vm130, %v90, 0
    %134 = vmatprep.subr.bf16.mxu0 0
    %135 = vmatpush1.bf16.msra.mxu0 %v122
    %136 = vmatprep.subr.bf16.mxu0 0
    %137 = vmatpush1.bf16.msra.mxu0 %v123
    %138 = vmatprep.subr.bf16.mxu0 0
    %139 = vmatpush1.bf16.msra.mxu0 %v124
    %140 = vmatprep.subr.bf16.mxu0 0
    %141 = vmatpush1.bf16.msra.mxu0 %v125
    %142 = vmatprep.subr.bf16.mxu0 0
    %143 = vmatpush1.bf16.msra.mxu0 0
    %144 = vmatprep.subr.bf16.mxu0 0
    %145 = vmatpush1.bf16.msra.mxu0 0
    %146 = vmatprep.subr.bf16.mxu0 0
    %147 = vmatpush1.bf16.msra.mxu0 0
    %148 = vmatprep.subr.bf16.mxu0 0
    %149 = vmatpush1.bf16.msra.mxu0 0
    %150 = vmatprep.subr.bf16.mxu0 0
    %151 = vmatpush1.bf16.msra.mxu0 0
    %152 = vmatprep.subr.bf16.mxu0 0
    %153 = vmatpush1.bf16.msra.mxu0 0
    %154 = vmatprep.subr.bf16.mxu0 0
    %155 = vmatpush1.bf16.msra.mxu0 0
    %156 = vmatprep.subr.bf16.mxu0 0
    %157 = vmatpush1.bf16.msra.mxu0 0
    %158 = vmatprep.subr.bf16.mxu0 0
    %159 = vmatpush1.bf16.msra.mxu0 0
    %160 = vmatprep.subr.bf16.mxu0 0
    %161 = vmatpush1.bf16.msra.mxu0 0
    %162 = vmatprep.subr.bf16.mxu0 0
    %163 = vmatpush1.bf16.msra.mxu0 0
    %164 = vmatprep.subr.bf16.mxu0 0
    %165 = vmatpush1.bf16.msra.mxu0 0
    %166 = vmatprep.mubr.bf16.mxu0 0
    %167 = vmatmul.mubr.bf16.gmra.mrb[0].mxu0 %v132
    %v168 = vpop.f32.mrb[0].mxu0
    %v169 = vadd.f32 %v104, %v168
    %v170 = vpop.f32.mrb[0].mxu0
    %v171 = vpop.f32.mrb[0].mxu0
    %v172 = vpop.f32.mrb[0].mxu0
    %173 = vdwg.mxu0
    %v174 = vmax.f32 %v169, 0.0
    %v175 = vpack.c.bf16 %v174, %v174
    %v176 = vld [vmem:[%s5] sm:$0xf]
    %v177 = vld [vmem:[%s5 + $0x4] sm:$0xf]
    %v178 = vld [vmem:[%s5 + $0x8] sm:$0xf]
    %v179 = vld [vmem:[%s5 + $0xc] sm:$0xf]
    %v180 = vld [vmem:[%s6] sm:$0x1]
    %v182 = vlaneseq
    %v183 = vshrl.u32 %v182, 7
    %v184 = vsub.s32 0, %v183
    %v185 = vrot.slane %v180, %v184
    %v191 = vunpack.c.l.b16 %v176
    %v192 = vunpack.c.l.b16 %v177
    %v193 = vunpack.c.l.b16 %v178
    %v194 = vunpack.c.l.b16 %v179
    %v195 = vpack.c.b16 %v192, %v191
    %v196 = vpack.c.b16 %v194, %v193
    %vm199 = vcmask 261120
    %v201 = vsel %vm199, %v175, 0
    %203 = vmatprep.subr.bf16.mxu0 0
    %204 = vmatpush1.bf16.msra.mxu0 %v195
    %205 = vmatprep.subr.bf16.mxu0 0
    %206 = vmatpush1.bf16.msra.mxu0 %v196
    %207 = vmatprep.subr.bf16.mxu0 0
    %208 = vmatpush1.bf16.msra.mxu0 0
    %209 = vmatprep.subr.bf16.mxu0 0
    %210 = vmatpush1.bf16.msra.mxu0 0
    %211 = vmatprep.subr.bf16.mxu0 0
    %212 = vmatpush1.bf16.msra.mxu0 0
    %213 = vmatprep.subr.bf16.mxu0 0
    %214 = vmatpush1.bf16.msra.mxu0 0
    %215 = vmatprep.subr.bf16.mxu0 0
    %216 = vmatpush1.bf16.msra.mxu0 0
    %217 = vmatprep.subr.bf16.mxu0 0
    %218 = vmatpush1.bf16.msra.mxu0 0
    %219 = vmatprep.subr.bf16.mxu0 0
    %220 = vmatpush1.bf16.msra.mxu0 0
    %221 = vmatprep.subr.bf16.mxu0 0
    %222 = vmatpush1.bf16.msra.mxu0 0
    %223 = vmatprep.subr.bf16.mxu0 0
    %224 = vmatpush1.bf16.msra.mxu0 0
    %225 = vmatprep.subr.bf16.mxu0 0
    %226 = vmatpush1.bf16.msra.mxu0 0
    %227 = vmatprep.subr.bf16.mxu0 0
    %228 = vmatpush1.bf16.msra.mxu0 0
    %229 = vmatprep.subr.bf16.mxu0 0
    %230 = vmatpush1.bf16.msra.mxu0 0
    %231 = vmatprep.subr.bf16.mxu0 0
    %232 = vmatpush1.bf16.msra.mxu0 0
    %233 = vmatprep.subr.bf16.mxu0 0
    %234 = vmatpush1.bf16.msra.mxu0 0
    %235 = vmatprep.mubr.bf16.mxu0 0
    %236 = vmatmul.mubr.bf16.gmra.mrb[0].mxu0 %v201
    %v237 = vpop.f32.mrb[0].mxu0
    %v238 = vadd.f32 %v185, %v237
    %v239 = vpop.f32.mrb[0].mxu0
    %v240 = vpop.f32.mrb[0].mxu0
    %v241 = vpop.f32.mrb[0].mxu0
    %242 = vdwg.mxu0
    %243 = vst [vmem:[#allocation2] sm:$0xff] %v238
    // Predicated region
    $region30: #{dqn_forward.1} parent=1 // pred_check
      _
    $region31: #{dqn_forward.1} parent=1 // pred_check_branch
      %245 = sbr.rel (0) target = $region33
    $region32: #{dqn_forward.1} parent=1 // pred_region
      %s247 = ssub.s32 128, 128
      %248 = vsyncadd [#allocation3], %s247
      %s250 = sshll.u32 [#allocation2], 4
      %s251 = int_to_ptr.vmem [resolvable:$true] %s250
      %253 = dma.vmem_to_hbm [thread:$0]  %s251, 128, %s7, [#allocation3]
    $region33: #{dqn_forward.1} parent=1 // pred_fallthru
      _
    // Predicated region
    $region34: #{dqn_forward.1} parent=1 // pred_check
      _
    $region35: #{dqn_forward.1} parent=1 // pred_check_branch
      %255 = sbr.rel (0) target = $region37
    $region36: #{dqn_forward.1} parent=1 // pred_region
      %256 = dma.done [#allocation3], 128
    $region37: #{dqn_forward.1} parent=1 // pred_fallthru
      _
    %257 = vsyncpa [#allocation3], 1

</llo_original>
